<compile_context>
chip_gen: v5e
topology: v5e:2x2
jax: 0.10.0
libtpu: 0.0.40
codegen_flags: <defaults>
</compile_context>

<pallas_src>
import math
import functools

import jax
import jax.numpy as jnp
import numpy as np
from jax import lax
from jax.experimental import pallas as pl
from jax.experimental.pallas import tpu as pltpu


def _cdiv(a, b):
    return -(-a // b)


def _sh_kernel(xyz_ref, out_ref, *, lmax):
    """Compute real spherical harmonics for one tile of points.

    xyz_ref: (3, TM, 128)  rows are the *input* (x, y, z) coordinates.
    out_ref: ((lmax+1)^2, TM, 128)
    """
    # sphericart order (x, y, z) = input (z, x, y) -- the module's ix=[2,0,1]
    # permutation, folded into the row reads (free).
    x = xyz_ref[2]
    y = xyz_ref[0]
    z = xyz_ref[1]
    odt = out_ref.dtype

    # Squares hoisted and reused for r2 and the normalized l>=2 terms.
    x2 = x * x
    y2 = y * y
    z2 = z * z
    r2 = x2 + y2 + z2
    # TODO(synk): squares can overflow f32 for |x| ~ 1.8e19 (torch-in-f64
    # would not); pre-scale by max-abs if such magnitudes ever occur.

    # normalized=True: evaluate on the unit direction x/r. r == 0 (coincident
    # points) produces nan in torch and is then zeroed by nan_to_num; here we
    # zero the direction once so every l >= 1 component comes out exactly 0.
    valid = r2 > 0.0
    rinv = jnp.where(valid, lax.rsqrt(r2), 0.0)
    x = jnp.where(valid, x * rinv, 0.0)
    y = jnp.where(valid, y * rinv, 0.0)
    z = jnp.where(valid, z * rinv, 0.0)

    pi = math.pi

    # l = 0 (constant, independent of direction -- stays constant at r == 0,
    # exactly like sphericart + nan_to_num).
    out_ref[0] = jnp.full(x.shape, 0.5 * math.sqrt(1.0 / pi), dtype=odt)

    if lmax >= 1:
        c1 = math.sqrt(3.0 / (4.0 * pi))
        out_ref[1] = (c1 * y).astype(odt)   # m = -1
        out_ref[2] = (c1 * z).astype(odt)   # m =  0
        out_ref[3] = (c1 * x).astype(odt)   # m =  1

    if lmax >= 2:
        inv_r2 = rinv * rinv
        x2 = x2 * inv_r2   # normalized squares, reusing the hoisted products
        y2 = y2 * inv_r2
        z2 = z2 * inv_r2
        c2a = 0.5 * math.sqrt(15.0 / pi)
        c2b = 0.25 * math.sqrt(5.0 / pi)
        c2c = 0.25 * math.sqrt(15.0 / pi)
        out_ref[4] = (c2a * x * y).astype(odt)                        # m = -2
        out_ref[5] = (c2a * y * z).astype(odt)                        # m = -1
        # (3z^2 - 1) has no x/y/z prefactor, so it needs the r>0 mask to be 0
        # at coincident points (torch nan_to_num behavior).
        out_ref[6] = jnp.where(valid, c2b * (3.0 * z2 - 1.0), 0.0).astype(odt)
        out_ref[7] = (c2a * x * z).astype(odt)                        # m =  1
        out_ref[8] = (c2c * (x2 - y2)).astype(odt)                    # m =  2

    if lmax >= 3:
        c3a = 0.25 * math.sqrt(35.0 / (2.0 * pi))
        c3b = 0.5 * math.sqrt(105.0 / pi)
        c3c = 0.25 * math.sqrt(21.0 / (2.0 * pi))
        c3d = 0.25 * math.sqrt(7.0 / pi)
        c3e = 0.25 * math.sqrt(105.0 / pi)
        out_ref[9]  = (c3a * y * (3.0 * x2 - y2)).astype(odt)         # m = -3
        out_ref[10] = (c3b * x * y * z).astype(odt)                   # m = -2
        out_ref[11] = (c3c * y * (5.0 * z2 - 1.0)).astype(odt)        # m = -1
        out_ref[12] = (c3d * z * (5.0 * z2 - 3.0)).astype(odt)        # m =  0
        out_ref[13] = (c3c * x * (5.0 * z2 - 1.0)).astype(odt)        # m =  1
        out_ref[14] = (c3e * z * (x2 - y2)).astype(odt)               # m =  2
        out_ref[15] = (c3a * x * (x2 - 3.0 * y2)).astype(odt)         # m =  3

    # TODO(synk): explicit formulas implemented up to lmax=3; sphericart's
    # generic recurrence for larger lmax is not reproduced here.


def _default_tile_points():
    """Generation-aware default tile (points per grid step)."""
    kind = ""
    try:
        kind = jax.devices()[0].device_kind.lower()
    except Exception:
        pass
    # v6e / v7x: 32 MiB default scoped VMEM -> TM=1024 (~19 MiB double-buffered)
    # v5e / unknown: 16 MiB default scoped VMEM -> TM=512  (~9.5 MiB)
    if "v6" in kind or "v7" in kind:
        return 131072      # TM = 1024
    return 65536           # TM = 512


def spherical_harmonic(x, lmax, tile_points=None):
    """JAX/Pallas equivalent of SphericalHarmonic.forward.

    x: (..., n, 3) coordinates.
    returns: (..., n, (lmax+1)**2) spherical-harmonic features, nan -> 0.
    """
    if lmax > 3:
        raise NotImplementedError("explicit formulas implemented up to lmax=3")

    orig_dtype = x.dtype
    *b, n, _ = x.shape
    s = (lmax + 1) ** 2

    # TPU has no native float64: all arithmetic is f32. The kernel stores
    # directly in the caller's dtype when the TPU supports it (bf16/f16/f32),
    # halving output HBM traffic for low-precision callers.
    if orig_dtype in (jnp.dtype(jnp.float32), jnp.dtype(jnp.bfloat16),
                      jnp.dtype(jnp.float16)):
        out_dtype = orig_dtype
    else:
        out_dtype = jnp.dtype(jnp.float32)
    out_itemsize = jnp.dtype(out_dtype).itemsize
    # Sublane alignment of the output block's second-to-last dim:
    # 8 for 32-bit, 16 for 16-bit dtypes (min tile (16, 128)).
    align = 16 if out_itemsize == 2 else 8

    xf = x.reshape(-1, 3).astype(jnp.float32)
    n_pts = xf.shape[0]

    # --- tiling: points as (3, M, 128), blocks of TM 128-wide chunks -------
    if tile_points is None:
        tile_points = _default_tile_points()
    n128 = _cdiv(n_pts, 128)                     # 128-point chunks needed
    n128 = max(align, _cdiv(n128, align) * align)
    tm = max(align, (tile_points // 128) // align * align)
    tm = min(tm, n128)
    grid = _cdiv(n128, tm)

    # Keep >= 2 grid steps (and prefer an even count for moderate N) when
    # there is enough work, so both v7x TensorCores drive HBM on this
    # bandwidth-bound kernel.
    if n128 >= 2 * align:
        if grid < 2:
            grid_target = 2
        elif grid % 2 == 1 and grid <= 16:
            grid_target = grid + 1
        else:
            grid_target = grid
        if grid_target != grid:
            tm = max(align, _cdiv(_cdiv(n128, grid_target), align) * align)
            grid = _cdiv(n128, tm)
    n_pad = grid * tm * 128

    # TODO(synk): accept a channels-first (3, N) producer layout to skip this
    # extra HBM pass over the input.
    xt = xf.T                                    # (3, n_pts)
    if n_pad != n_pts:
        xt = jnp.pad(xt, ((0, 0), (0, n_pad - n_pts)))
    xt = xt.reshape(3, n_pad // 128, 128)

    # Explicit VMEM budget covering the double-buffered in/out blocks plus
    # headroom; stays well under every generation's physical VMEM.
    vmem_bytes = 2 * (3 * tm * 128 * 4 + s * tm * 128 * out_itemsize) + (4 << 20)
    vmem_bytes = min(max(vmem_bytes, 16 << 20), 48 << 20)

    out = pl.pallas_call(
        functools.partial(_sh_kernel, lmax=lmax),
        out_shape=jax.ShapeDtypeStruct((s, n_pad // 128, 128), out_dtype),
        grid=(grid,),
        in_specs=[pl.BlockSpec((3, tm, 128), lambda i: (0, i, 0))],
        out_specs=pl.BlockSpec((s, tm, 128), lambda i: (0, i, 0)),
        compiler_params=pltpu.CompilerParams(
            dimension_semantics=("parallel",),
            vmem_limit_bytes=vmem_bytes),
    )(xt)

    # TODO(synk): consumers that can take a channels-first (s, N) layout
    # should read `out` directly and skip this full (N, s) transpose pass.
    # Here slice + transpose + cast fuse into a single XLA copy.
    sh = out.reshape(s, n_pad).T[:n_pts]
    if sh.dtype != orig_dtype:
        sh = sh.astype(orig_dtype)
    return sh.reshape(*b, n, s)


def _sh_reference(x, lmax):
    """Pure-numpy f64 reference (same convention, torch nan_to_num semantics)."""
    xp = np.asarray(x, dtype=np.float64).reshape(-1, 3)
    # ix = [2, 0, 1] permutation
    xs, ys, zs = xp[:, 2], xp[:, 0], xp[:, 1]
    r = np.sqrt(xs * xs + ys * ys + zs * zs)
    with np.errstate(divide="ignore", invalid="ignore"):
        xn, yn, zn = xs / r, ys / r, zs / r
    pi = math.pi
    cols = [np.full_like(r, 0.5 * math.sqrt(1.0 / pi))]
    if lmax >= 1:
        c1 = math.sqrt(3.0 / (4.0 * pi))
        cols += [c1 * yn, c1 * zn, c1 * xn]
    if lmax >= 2:
        c2a = 0.5 * math.sqrt(15.0 / pi)
        c2b = 0.25 * math.sqrt(5.0 / pi)
        c2c = 0.25 * math.sqrt(15.0 / pi)
        cols += [c2a * xn * yn, c2a * yn * zn,
                 c2b * (3.0 * zn * zn - 1.0),
                 c2a * xn * zn, c2c * (xn * xn - yn * yn)]
    if lmax >= 3:
        c3a = 0.25 * math.sqrt(35.0 / (2.0 * pi))
        c3b = 0.5 * math.sqrt(105.0 / pi)
        c3c = 0.25 * math.sqrt(21.0 / (2.0 * pi))
        c3d = 0.25 * math.sqrt(7.0 / pi)
        c3e = 0.25 * math.sqrt(105.0 / pi)
        x2, y2, z2 = xn * xn, yn * yn, zn * zn
        cols += [c3a * yn * (3.0 * x2 - y2), c3b * xn * yn * zn,
                 c3c * yn * (5.0 * z2 - 1.0), c3d * zn * (5.0 * z2 - 3.0),
                 c3c * xn * (5.0 * z2 - 1.0), c3e * zn * (x2 - y2),
                 c3a * xn * (x2 - 3.0 * y2)]
    out = np.stack(cols, axis=-1)
    return np.nan_to_num(out, nan=0.0)


if __name__ == "__main__":
    key = jax.random.PRNGKey(0)
    # batch=2, n=8 points, 3 coordinates (as implied by forward's (..., n, 3))
    x = jax.random.normal(key, (2, 8, 3), dtype=jnp.float32)
    # include a coincident-point (0,0,0) row to exercise the nan->0 path
    x = x.at[0, 0, :].set(0.0)

    lmax = 3
    sh = jax.block_until_ready(spherical_harmonic(x, lmax))

    s = (lmax + 1) ** 2
    assert sh.shape == (2, 8, s), sh.shape
    assert bool(jnp.all(jnp.isfinite(sh)))
    # l=0 component is the constant 1/(2*sqrt(pi))
    assert bool(jnp.allclose(sh[..., 0], 0.5 / math.sqrt(math.pi), atol=1e-6))
    # coincident point: every l >= 1 component must be exactly zero
    assert bool(jnp.all(sh[0, 0, 1:] == 0.0))
    # end-to-end numeric check against an f64 reference (validates the
    # ix=[2,0,1] fold, tiling/padding and the epilogue transpose)
    ref = _sh_reference(np.asarray(x), lmax).reshape(2, 8, s)
    np.testing.assert_allclose(np.asarray(sh, dtype=np.float64), ref,
                               rtol=1e-4, atol=1e-5)

    # medium-size input: exercises the multi-step (>=2, "parallel") grid path
    x_med = jax.random.normal(jax.random.PRNGKey(1), (1, 1100, 3),
                              dtype=jnp.float32)
    sh_med = jax.block_until_ready(spherical_harmonic(x_med, lmax))
    assert sh_med.shape == (1, 1100, s)
    ref_med = _sh_reference(np.asarray(x_med), lmax).reshape(1, 1100, s)
    np.testing.assert_allclose(np.asarray(sh_med, dtype=np.float64), ref_med,
                               rtol=1e-4, atol=1e-5)

    # bf16 caller path (kernel stores bf16 directly; TM aligned to 16)
    x_bf16 = x.astype(jnp.bfloat16)
    sh_bf16 = jax.block_until_ready(spherical_harmonic(x_bf16, 2))
    assert sh_bf16.shape == (2, 8, 9) and sh_bf16.dtype == jnp.bfloat16
    ref_bf16 = _sh_reference(np.asarray(x_bf16, dtype=np.float32), 2)
    np.testing.assert_allclose(
        np.asarray(sh_bf16, dtype=np.float64).reshape(-1, 9), ref_bf16,
        rtol=0.02, atol=0.02)

    print("KERNEL_OK")
</pallas_src>

<mosaic_0001>
module attributes {stable_mosaic.version = 11 : i64} {
  func.func @_sh_kernel(%arg0: i32, %arg1: memref<3x8x128xf32, #tpu.memory_space<vmem>>, %arg2: memref<16x8x128xf32, #tpu.memory_space<vmem>>) attributes {dimension_semantics = [#tpu.dimension_semantics<parallel>], iteration_bounds = array<i64: 1>, scalar_prefetch = 0 : i64, scratch_operands = 0 : i64, tpu.core_type = #tpu.core_type<tc>, window_params = [{transform_indices = @transform_0, window_bounds = array<i64: 3, 8, 128>}, {transform_indices = @transform_1, window_bounds = array<i64: 16, 8, 128>}]} {
    %c2 = arith.constant 2 : index
    %c0 = arith.constant 0 : index
    %c0_0 = arith.constant 0 : index
    %0 = vector.load %arg1[%c2, %c0, %c0_0] : memref<3x8x128xf32, #tpu.memory_space<vmem>>, vector<1x8x128xf32>
    %1 = vector.shape_cast %0 : vector<1x8x128xf32> to vector<8x128xf32>
    %c0_1 = arith.constant 0 : index
    %c0_2 = arith.constant 0 : index
    %c0_3 = arith.constant 0 : index
    %2 = vector.load %arg1[%c0_1, %c0_2, %c0_3] : memref<3x8x128xf32, #tpu.memory_space<vmem>>, vector<1x8x128xf32>
    %3 = vector.shape_cast %2 : vector<1x8x128xf32> to vector<8x128xf32>
    %c1 = arith.constant 1 : index
    %c0_4 = arith.constant 0 : index
    %c0_5 = arith.constant 0 : index
    %4 = vector.load %arg1[%c1, %c0_4, %c0_5] : memref<3x8x128xf32, #tpu.memory_space<vmem>>, vector<1x8x128xf32>
    %5 = vector.shape_cast %4 : vector<1x8x128xf32> to vector<8x128xf32>
    %6 = arith.mulf %1, %1 : vector<8x128xf32>
    %7 = arith.mulf %3, %3 : vector<8x128xf32>
    %8 = arith.mulf %5, %5 : vector<8x128xf32>
    %9 = arith.addf %6, %7 : vector<8x128xf32>
    %10 = arith.addf %9, %8 : vector<8x128xf32>
    %cst = arith.constant 0.000000e+00 : f32
    %11 = vector.broadcast %cst : f32 to vector<8x128xf32>
    %12 = arith.cmpf ogt, %10, %11 : vector<8x128xf32>
    %13 = math.rsqrt %10 : vector<8x128xf32>
    %cst_6 = arith.constant 0.000000e+00 : f32
    %14 = vector.broadcast %cst_6 : f32 to vector<8x128xf32>
    %15 = arith.select %12, %13, %14 : vector<8x128xi1>, vector<8x128xf32>
    %16 = arith.mulf %1, %15 : vector<8x128xf32>
    %cst_7 = arith.constant 0.000000e+00 : f32
    %17 = vector.broadcast %cst_7 : f32 to vector<8x128xf32>
    %18 = arith.select %12, %16, %17 : vector<8x128xi1>, vector<8x128xf32>
    %19 = arith.mulf %3, %15 : vector<8x128xf32>
    %cst_8 = arith.constant 0.000000e+00 : f32
    %20 = vector.broadcast %cst_8 : f32 to vector<8x128xf32>
    %21 = arith.select %12, %19, %20 : vector<8x128xi1>, vector<8x128xf32>
    %22 = arith.mulf %5, %15 : vector<8x128xf32>
    %cst_9 = arith.constant 0.000000e+00 : f32
    %23 = vector.broadcast %cst_9 : f32 to vector<8x128xf32>
    %24 = arith.select %12, %22, %23 : vector<8x128xi1>, vector<8x128xf32>
    %cst_10 = arith.constant 0.282094806 : f32
    %25 = vector.broadcast %cst_10 : f32 to vector<8x128xf32>
    %c0_11 = arith.constant 0 : index
    %c0_12 = arith.constant 0 : index
    %c0_13 = arith.constant 0 : index
    %26 = vector.load %arg2[%c0_11, %c0_12, %c0_13] : memref<16x8x128xf32, #tpu.memory_space<vmem>>, vector<1x8x128xf32>
    %27 = vector.shape_cast %26 : vector<1x8x128xf32> to vector<8x128xf32>
    %28 = vector.shape_cast %25 : vector<8x128xf32> to vector<1x8x128xf32>
    tpu.vector_store %arg2[%c0_11, %c0_12, %c0_13], %28 {strides = array<i32>} : memref<16x8x128xf32, #tpu.memory_space<vmem>>, vector<1x8x128xf32>,
    %cst_14 = arith.constant 0.488602519 : f32
    %29 = vector.broadcast %cst_14 : f32 to vector<8x128xf32>
    %30 = arith.mulf %29, %21 : vector<8x128xf32>
    %c1_15 = arith.constant 1 : index
    %c0_16 = arith.constant 0 : index
    %c0_17 = arith.constant 0 : index
    %31 = vector.load %arg2[%c1_15, %c0_16, %c0_17] : memref<16x8x128xf32, #tpu.memory_space<vmem>>, vector<1x8x128xf32>
    %32 = vector.shape_cast %31 : vector<1x8x128xf32> to vector<8x128xf32>
    %33 = vector.shape_cast %30 : vector<8x128xf32> to vector<1x8x128xf32>
    tpu.vector_store %arg2[%c1_15, %c0_16, %c0_17], %33 {strides = array<i32>} : memref<16x8x128xf32, #tpu.memory_space<vmem>>, vector<1x8x128xf32>,
    %cst_18 = arith.constant 0.488602519 : f32
    %34 = vector.broadcast %cst_18 : f32 to vector<8x128xf32>
    %35 = arith.mulf %34, %24 : vector<8x128xf32>
    %c2_19 = arith.constant 2 : index
    %c0_20 = arith.constant 0 : index
    %c0_21 = arith.constant 0 : index
    %36 = vector.load %arg2[%c2_19, %c0_20, %c0_21] : memref<16x8x128xf32, #tpu.memory_space<vmem>>, vector<1x8x128xf32>
    %37 = vector.shape_cast %36 : vector<1x8x128xf32> to vector<8x128xf32>
    %38 = vector.shape_cast %35 : vector<8x128xf32> to vector<1x8x128xf32>
    tpu.vector_store %arg2[%c2_19, %c0_20, %c0_21], %38 {strides = array<i32>} : memref<16x8x128xf32, #tpu.memory_space<vmem>>, vector<1x8x128xf32>,
    %cst_22 = arith.constant 0.488602519 : f32
    %39 = vector.broadcast %cst_22 : f32 to vector<8x128xf32>
    %40 = arith.mulf %39, %18 : vector<8x128xf32>
    %c3 = arith.constant 3 : index
    %c0_23 = arith.constant 0 : index
    %c0_24 = arith.constant 0 : index
    %41 = vector.load %arg2[%c3, %c0_23, %c0_24] : memref<16x8x128xf32, #tpu.memory_space<vmem>>, vector<1x8x128xf32>
    %42 = vector.shape_cast %41 : vector<1x8x128xf32> to vector<8x128xf32>
    %43 = vector.shape_cast %40 : vector<8x128xf32> to vector<1x8x128xf32>
    tpu.vector_store %arg2[%c3, %c0_23, %c0_24], %43 {strides = array<i32>} : memref<16x8x128xf32, #tpu.memory_space<vmem>>, vector<1x8x128xf32>,
    %44 = arith.mulf %15, %15 : vector<8x128xf32>
    %45 = arith.mulf %6, %44 : vector<8x128xf32>
    %46 = arith.mulf %7, %44 : vector<8x128xf32>
    %47 = arith.mulf %8, %44 : vector<8x128xf32>
    %cst_25 = arith.constant 1.09254849 : f32
    %48 = vector.broadcast %cst_25 : f32 to vector<8x128xf32>
    %49 = arith.mulf %48, %18 : vector<8x128xf32>
    %50 = arith.mulf %49, %21 : vector<8x128xf32>
    %c4 = arith.constant 4 : index
    %c0_26 = arith.constant 0 : index
    %c0_27 = arith.constant 0 : index
    %51 = vector.load %arg2[%c4, %c0_26, %c0_27] : memref<16x8x128xf32, #tpu.memory_space<vmem>>, vector<1x8x128xf32>
    %52 = vector.shape_cast %51 : vector<1x8x128xf32> to vector<8x128xf32>
    %53 = vector.shape_cast %50 : vector<8x128xf32> to vector<1x8x128xf32>
    tpu.vector_store %arg2[%c4, %c0_26, %c0_27], %53 {strides = array<i32>} : memref<16x8x128xf32, #tpu.memory_space<vmem>>, vector<1x8x128xf32>,
    %cst_28 = arith.constant 1.09254849 : f32
    %54 = vector.broadcast %cst_28 : f32 to vector<8x128xf32>
    %55 = arith.mulf %54, %21 : vector<8x128xf32>
    %56 = arith.mulf %55, %24 : vector<8x128xf32>
    %c5 = arith.constant 5 : index
    %c0_29 = arith.constant 0 : index
    %c0_30 = arith.constant 0 : index
    %57 = vector.load %arg2[%c5, %c0_29, %c0_30] : memref<16x8x128xf32, #tpu.memory_space<vmem>>, vector<1x8x128xf32>
    %58 = vector.shape_cast %57 : vector<1x8x128xf32> to vector<8x128xf32>
    %59 = vector.shape_cast %56 : vector<8x128xf32> to vector<1x8x128xf32>
    tpu.vector_store %arg2[%c5, %c0_29, %c0_30], %59 {strides = array<i32>} : memref<16x8x128xf32, #tpu.memory_space<vmem>>, vector<1x8x128xf32>,
    %cst_31 = arith.constant 3.000000e+00 : f32
    %60 = vector.broadcast %cst_31 : f32 to vector<8x128xf32>
    %61 = arith.mulf %60, %47 : vector<8x128xf32>
    %cst_32 = arith.constant 1.000000e+00 : f32
    %62 = vector.broadcast %cst_32 : f32 to vector<8x128xf32>
    %63 = arith.subf %61, %62 : vector<8x128xf32>
    %cst_33 = arith.constant 0.31539157 : f32
    %64 = vector.broadcast %cst_33 : f32 to vector<8x128xf32>
    %65 = arith.mulf %64, %63 : vector<8x128xf32>
    %cst_34 = arith.constant 0.000000e+00 : f32
    %66 = vector.broadcast %cst_34 : f32 to vector<8x128xf32>
    %67 = arith.select %12, %65, %66 : vector<8x128xi1>, vector<8x128xf32>
    %c6 = arith.constant 6 : index
    %c0_35 = arith.constant 0 : index
    %c0_36 = arith.constant 0 : index
    %68 = vector.load %arg2[%c6, %c0_35, %c0_36] : memref<16x8x128xf32, #tpu.memory_space<vmem>>, vector<1x8x128xf32>
    %69 = vector.shape_cast %68 : vector<1x8x128xf32> to vector<8x128xf32>
    %70 = vector.shape_cast %67 : vector<8x128xf32> to vector<1x8x128xf32>
    tpu.vector_store %arg2[%c6, %c0_35, %c0_36], %70 {strides = array<i32>} : memref<16x8x128xf32, #tpu.memory_space<vmem>>, vector<1x8x128xf32>,
    %cst_37 = arith.constant 1.09254849 : f32
    %71 = vector.broadcast %cst_37 : f32 to vector<8x128xf32>
    %72 = arith.mulf %71, %18 : vector<8x128xf32>
    %73 = arith.mulf %72, %24 : vector<8x128xf32>
    %c7 = arith.constant 7 : index
    %c0_38 = arith.constant 0 : index
    %c0_39 = arith.constant 0 : index
    %74 = vector.load %arg2[%c7, %c0_38, %c0_39] : memref<16x8x128xf32, #tpu.memory_space<vmem>>, vector<1x8x128xf32>
    %75 = vector.shape_cast %74 : vector<1x8x128xf32> to vector<8x128xf32>
    %76 = vector.shape_cast %73 : vector<8x128xf32> to vector<1x8x128xf32>
    tpu.vector_store %arg2[%c7, %c0_38, %c0_39], %76 {strides = array<i32>} : memref<16x8x128xf32, #tpu.memory_space<vmem>>, vector<1x8x128xf32>,
    %77 = arith.subf %45, %46 : vector<8x128xf32>
    %cst_40 = arith.constant 0.546274245 : f32
    %78 = vector.broadcast %cst_40 : f32 to vector<8x128xf32>
    %79 = arith.mulf %78, %77 : vector<8x128xf32>
    %c8 = arith.constant 8 : index
    %c0_41 = arith.constant 0 : index
    %c0_42 = arith.constant 0 : index
    %80 = vector.load %arg2[%c8, %c0_41, %c0_42] : memref<16x8x128xf32, #tpu.memory_space<vmem>>, vector<1x8x128xf32>
    %81 = vector.shape_cast %80 : vector<1x8x128xf32> to vector<8x128xf32>
    %82 = vector.shape_cast %79 : vector<8x128xf32> to vector<1x8x128xf32>
    tpu.vector_store %arg2[%c8, %c0_41, %c0_42], %82 {strides = array<i32>} : memref<16x8x128xf32, #tpu.memory_space<vmem>>, vector<1x8x128xf32>,
    %cst_43 = arith.constant 0.590043604 : f32
    %83 = vector.broadcast %cst_43 : f32 to vector<8x128xf32>
    %84 = arith.mulf %83, %21 : vector<8x128xf32>
    %cst_44 = arith.constant 3.000000e+00 : f32
    %85 = vector.broadcast %cst_44 : f32 to vector<8x128xf32>
    %86 = arith.mulf %85, %45 : vector<8x128xf32>
    %87 = arith.subf %86, %46 : vector<8x128xf32>
    %88 = arith.mulf %84, %87 : vector<8x128xf32>
    %c9 = arith.constant 9 : index
    %c0_45 = arith.constant 0 : index
    %c0_46 = arith.constant 0 : index
    %89 = vector.load %arg2[%c9, %c0_45, %c0_46] : memref<16x8x128xf32, #tpu.memory_space<vmem>>, vector<1x8x128xf32>
    %90 = vector.shape_cast %89 : vector<1x8x128xf32> to vector<8x128xf32>
    %91 = vector.shape_cast %88 : vector<8x128xf32> to vector<1x8x128xf32>
    tpu.vector_store %arg2[%c9, %c0_45, %c0_46], %91 {strides = array<i32>} : memref<16x8x128xf32, #tpu.memory_space<vmem>>, vector<1x8x128xf32>,
    %cst_47 = arith.constant 2.89061141 : f32
    %92 = vector.broadcast %cst_47 : f32 to vector<8x128xf32>
    %93 = arith.mulf %92, %18 : vector<8x128xf32>
    %94 = arith.mulf %93, %21 : vector<8x128xf32>
    %95 = arith.mulf %94, %24 : vector<8x128xf32>
    %c10 = arith.constant 10 : index
    %c0_48 = arith.constant 0 : index
    %c0_49 = arith.constant 0 : index
    %96 = vector.load %arg2[%c10, %c0_48, %c0_49] : memref<16x8x128xf32, #tpu.memory_space<vmem>>, vector<1x8x128xf32>
    %97 = vector.shape_cast %96 : vector<1x8x128xf32> to vector<8x128xf32>
    %98 = vector.shape_cast %95 : vector<8x128xf32> to vector<1x8x128xf32>
    tpu.vector_store %arg2[%c10, %c0_48, %c0_49], %98 {strides = array<i32>} : memref<16x8x128xf32, #tpu.memory_space<vmem>>, vector<1x8x128xf32>,
    %cst_50 = arith.constant 0.457045794 : f32
    %99 = vector.broadcast %cst_50 : f32 to vector<8x128xf32>
    %100 = arith.mulf %99, %21 : vector<8x128xf32>
    %cst_51 = arith.constant 5.000000e+00 : f32
    %101 = vector.broadcast %cst_51 : f32 to vector<8x128xf32>
    %102 = arith.mulf %101, %47 : vector<8x128xf32>
    %cst_52 = arith.constant 1.000000e+00 : f32
    %103 = vector.broadcast %cst_52 : f32 to vector<8x128xf32>
    %104 = arith.subf %102, %103 : vector<8x128xf32>
    %105 = arith.mulf %100, %104 : vector<8x128xf32>
    %c11 = arith.constant 11 : index
    %c0_53 = arith.constant 0 : index
    %c0_54 = arith.constant 0 : index
    %106 = vector.load %arg2[%c11, %c0_53, %c0_54] : memref<16x8x128xf32, #tpu.memory_space<vmem>>, vector<1x8x128xf32>
    %107 = vector.shape_cast %106 : vector<1x8x128xf32> to vector<8x128xf32>
    %108 = vector.shape_cast %105 : vector<8x128xf32> to vector<1x8x128xf32>
    tpu.vector_store %arg2[%c11, %c0_53, %c0_54], %108 {strides = array<i32>} : memref<16x8x128xf32, #tpu.memory_space<vmem>>, vector<1x8x128xf32>,
    %cst_55 = arith.constant 0.373176336 : f32
    %109 = vector.broadcast %cst_55 : f32 to vector<8x128xf32>
    %110 = arith.mulf %109, %24 : vector<8x128xf32>
    %cst_56 = arith.constant 5.000000e+00 : f32
    %111 = vector.broadcast %cst_56 : f32 to vector<8x128xf32>
    %112 = arith.mulf %111, %47 : vector<8x128xf32>
    %cst_57 = arith.constant 3.000000e+00 : f32
    %113 = vector.broadcast %cst_57 : f32 to vector<8x128xf32>
    %114 = arith.subf %112, %113 : vector<8x128xf32>
    %115 = arith.mulf %110, %114 : vector<8x128xf32>
    %c12 = arith.constant 12 : index
    %c0_58 = arith.constant 0 : index
    %c0_59 = arith.constant 0 : index
    %116 = vector.load %arg2[%c12, %c0_58, %c0_59] : memref<16x8x128xf32, #tpu.memory_space<vmem>>, vector<1x8x128xf32>
    %117 = vector.shape_cast %116 : vector<1x8x128xf32> to vector<8x128xf32>
    %118 = vector.shape_cast %115 : vector<8x128xf32> to vector<1x8x128xf32>
    tpu.vector_store %arg2[%c12, %c0_58, %c0_59], %118 {strides = array<i32>} : memref<16x8x128xf32, #tpu.memory_space<vmem>>, vector<1x8x128xf32>,
    %cst_60 = arith.constant 0.457045794 : f32
    %119 = vector.broadcast %cst_60 : f32 to vector<8x128xf32>
    %120 = arith.mulf %119, %18 : vector<8x128xf32>
    %cst_61 = arith.constant 5.000000e+00 : f32
    %121 = vector.broadcast %cst_61 : f32 to vector<8x128xf32>
    %122 = arith.mulf %121, %47 : vector<8x128xf32>
    %cst_62 = arith.constant 1.000000e+00 : f32
    %123 = vector.broadcast %cst_62 : f32 to vector<8x128xf32>
    %124 = arith.subf %122, %123 : vector<8x128xf32>
    %125 = arith.mulf %120, %124 : vector<8x128xf32>
    %c13 = arith.constant 13 : index
    %c0_63 = arith.constant 0 : index
    %c0_64 = arith.constant 0 : index
    %126 = vector.load %arg2[%c13, %c0_63, %c0_64] : memref<16x8x128xf32, #tpu.memory_space<vmem>>, vector<1x8x128xf32>
    %127 = vector.shape_cast %126 : vector<1x8x128xf32> to vector<8x128xf32>
    %128 = vector.shape_cast %125 : vector<8x128xf32> to vector<1x8x128xf32>
    tpu.vector_store %arg2[%c13, %c0_63, %c0_64], %128 {strides = array<i32>} : memref<16x8x128xf32, #tpu.memory_space<vmem>>, vector<1x8x128xf32>,
    %cst_65 = arith.constant 1.44530571 : f32
    %129 = vector.broadcast %cst_65 : f32 to vector<8x128xf32>
    %130 = arith.mulf %129, %24 : vector<8x128xf32>
    %131 = arith.subf %45, %46 : vector<8x128xf32>
    %132 = arith.mulf %130, %131 : vector<8x128xf32>
    %c14 = arith.constant 14 : index
    %c0_66 = arith.constant 0 : index
    %c0_67 = arith.constant 0 : index
    %133 = vector.load %arg2[%c14, %c0_66, %c0_67] : memref<16x8x128xf32, #tpu.memory_space<vmem>>, vector<1x8x128xf32>
    %134 = vector.shape_cast %133 : vector<1x8x128xf32> to vector<8x128xf32>
    %135 = vector.shape_cast %132 : vector<8x128xf32> to vector<1x8x128xf32>
    tpu.vector_store %arg2[%c14, %c0_66, %c0_67], %135 {strides = array<i32>} : memref<16x8x128xf32, #tpu.memory_space<vmem>>, vector<1x8x128xf32>,
    %cst_68 = arith.constant 0.590043604 : f32
    %136 = vector.broadcast %cst_68 : f32 to vector<8x128xf32>
    %137 = arith.mulf %136, %18 : vector<8x128xf32>
    %cst_69 = arith.constant 3.000000e+00 : f32
    %138 = vector.broadcast %cst_69 : f32 to vector<8x128xf32>
    %139 = arith.mulf %138, %46 : vector<8x128xf32>
    %140 = arith.subf %45, %139 : vector<8x128xf32>
    %141 = arith.mulf %137, %140 : vector<8x128xf32>
    %c15 = arith.constant 15 : index
    %c0_70 = arith.constant 0 : index
    %c0_71 = arith.constant 0 : index
    %142 = vector.load %arg2[%c15, %c0_70, %c0_71] : memref<16x8x128xf32, #tpu.memory_space<vmem>>, vector<1x8x128xf32>
    %143 = vector.shape_cast %142 : vector<1x8x128xf32> to vector<8x128xf32>
    %144 = vector.shape_cast %141 : vector<8x128xf32> to vector<1x8x128xf32>
    tpu.vector_store %arg2[%c15, %c0_70, %c0_71], %144 {strides = array<i32>} : memref<16x8x128xf32, #tpu.memory_space<vmem>>, vector<1x8x128xf32>,
    return
  }
  func.func @transform_0(%arg0: i32) -> (i32, i32, i32) {
    %c0_i32 = arith.constant 0 : i32
    %c0_i32_0 = arith.constant 0 : i32
    %c0_i32_1 = arith.constant 0 : i32
    return %c0_i32, %arg0, %c0_i32_0 : i32, i32, i32
  }
  func.func @transform_1(%arg0: i32) -> (i32, i32, i32) {
    %c0_i32 = arith.constant 0 : i32
    %c0_i32_0 = arith.constant 0 : i32
    %c0_i32_1 = arith.constant 0 : i32
    return %c0_i32, %arg0, %c0_i32_0 : i32, i32, i32
  }
}

</mosaic_0001>

<llo_original>
// kernel: tpu_custom_call.1
$region0: #{tpu_custom_call.1}
  #allocation0 [shape = 'u32[]', space=smem, size = 0x4, offset = 0x4, fixed_abs, tag = 'smem constant byte address 0x4 - core index']
  #allocation1 [shape = 'u32[72,128]{1,0:T(1,128)}', space=vmem, size = 0x9000, scoped, tag = 'internal scratch']
  %s0 = inlined_call_operand.hbm [shape: f32[3,8,128], index: 0, kind: input, shape index: {}]
  %s1 = inlined_call_operand.hbm [shape: f32[16,8,128], index: 1, kind: output, shape index: {}]
  %s2 = sld [smem:[#allocation0]]
  $region18: #{tpu_custom_call.1} parent=0
    _
  %s4 = ssub.s32 1, %s2
  %s5 = scalar_select 0, %s4, %s2
  $region1: #{tpu_custom_call.1} parent=0
    #allocation2 [shape = 'u8[12288]{0}', space=vmem, size = 0x3000, scoped, tag = 'input window, operand 0, single buffered']
    #allocation3 [shape = 's32[1]{0}', space=sflag, size = 0x4, scoped, tag = 'scoped memory for tpu_custom_call.1']
    #allocation4 [shape = 's32[1]{0}', space=sflag, size = 0x4, scoped, tag = 'scoped memory for tpu_custom_call.1']
    #allocation5 [shape = 'u8[65536]{0}', space=vmem, size = 0x10000, scoped, tag = 'output window, operand 0, single buffered']
    %6 = vsyncpa [#allocation3], 0
    %7 = vsyncpa [#allocation4], 0
    // Predicated region
    $region2: #{tpu_custom_call.1} parent=1 // pred_check
      _
    $region3: #{tpu_custom_call.1} parent=1 // pred_check_branch
      %9 = sbr.rel (0) target = $region5
    $region4: #{tpu_custom_call.1} parent=1 // pred_region
      %11 = vsyncadd [#allocation3], 0
      %s12 = sshll.u32 %s0, 4
      %s13 = int_to_ptr.hbm [resolvable:$true] %s12
      %s14 = sshll.u32 [#allocation2], 4
      %s15 = int_to_ptr.vmem [resolvable:$true] %s14
      %20 = dma.hbm_to_vmem [thread:$0]  %s13, 384, %s15, [#allocation3], 128, 128, 8
    $region5: #{tpu_custom_call.1} parent=1 // pred_fallthru
      _
    // Predicated region
    $region6: #{tpu_custom_call.1} parent=1 // pred_check
      _
    $region7: #{tpu_custom_call.1} parent=1 // pred_check_branch
      %22 = sbr.rel (0) target = $region9
    $region8: #{tpu_custom_call.1} parent=1 // pred_region
      %24 = dma.done [#allocation3], 384
    $region9: #{tpu_custom_call.1} parent=1 // pred_fallthru
      _
    %s25 = scalar_lea.vmem [#allocation2], 16
    %v26 = vld [vmem:[%s25] sm:$0xff]
    %v27 = vld [vmem:[#allocation2] sm:$0xff]
    %s28 = scalar_lea.vmem [#allocation2], 8
    %v29 = vld [vmem:[%s28] sm:$0xff]
    %v30 = vmul.f32 %v26, %v26
    %v31 = vmul.f32 %v27, %v27
    %v32 = vmul.f32 %v29, %v29
    %v33 = vadd.f32 %v30, %v31
    %v34 = vadd.f32 %v33, %v32
    %vm35 = vcmp.gt.f32.partialorder %v34, 0.0
    %v36 = vrsqrt.pop %v34
    %v37 = vmul.f32 %v36, %v34
    %v38 = vmul.f32 %v37, %v36
    %v39 = vmul.f32 0.5, %v38
    %v40 = vsub.f32 1.5, %v39
    %v41 = vmul.f32 %v36, %v40
    %vm42 = vweird.f32 %v34
    %vm43 = vweird.f32 %v36
    %vm44 = vmor %vm42, %vm43
    %v45 = vsel %vm44, %v36, %v41
    %v46 = vsel %vm35, %v45, 0.0
    %v47 = vmul.f32 %v26, %v46
    %v48 = vsel %vm35, %v47, 0.0
    %v49 = vmul.f32 %v27, %v46
    %v50 = vsel %vm35, %v49, 0.0
    %v51 = vmul.f32 %v29, %v46
    %v52 = vsel %vm35, %v51, 0.0
    %53 = vst [vmem:[#allocation5] sm:$0xff] 0.2820948
    %v54 = vmul.f32 %v50, 0.48860252
    %s55 = scalar_lea.vmem [#allocation5], 8
    %56 = vst [vmem:[%s55] sm:$0xff] %v54
    %v57 = vmul.f32 %v52, 0.48860252
    %s58 = scalar_lea.vmem [#allocation5], 16
    %59 = vst [vmem:[%s58] sm:$0xff] %v57
    %v60 = vmul.f32 %v48, 0.48860252
    %s61 = scalar_lea.vmem [#allocation5], 24
    %62 = vst [vmem:[%s61] sm:$0xff] %v60
    %v63 = vmul.f32 %v46, %v46
    %v64 = vmul.f32 %v30, %v63
    %v65 = vmul.f32 %v31, %v63
    %v66 = vmul.f32 %v32, %v63
    %v67 = vmul.f32 %v48, 1.0925485
    %v68 = vmul.f32 %v67, %v50
    %s69 = scalar_lea.vmem [#allocation5], 32
    %70 = vst [vmem:[%s69] sm:$0xff] %v68
    %v71 = vmul.f32 %v50, 1.0925485
    %v72 = vmul.f32 %v71, %v52
    %s73 = scalar_lea.vmem [#allocation5], 40
    %74 = vst [vmem:[%s73] sm:$0xff] %v72
    %v75 = vmul.f32 %v66, 3.0
    %v76 = vsub.f32 %v75, 1.0
    %v77 = vmul.f32 %v76, 0.31539157
    %v78 = vsel %vm35, %v77, 0.0
    %s79 = scalar_lea.vmem [#allocation5], 48
    %80 = vst [vmem:[%s79] sm:$0xff] %v78
    %v81 = vmul.f32 %v67, %v52
    %s82 = scalar_lea.vmem [#allocation5], 56
    %83 = vst [vmem:[%s82] sm:$0xff] %v81
    %v84 = vsub.f32 %v64, %v65
    %v85 = vmul.f32 %v84, 0.54627424
    %s86 = scalar_lea.vmem [#allocation5], 64
    %87 = vst [vmem:[%s86] sm:$0xff] %v85
    %v88 = vmul.f32 %v50, 0.5900436
    %v89 = vmul.f32 %v64, 3.0
    %v90 = vsub.f32 %v89, %v65
    %v91 = vmul.f32 %v88, %v90
    %s92 = scalar_lea.vmem [#allocation5], 72
    %93 = vst [vmem:[%s92] sm:$0xff] %v91
    %v94 = vmul.f32 %v48, 2.8906114
    %v95 = vmul.f32 %v94, %v50
    %v96 = vmul.f32 %v95, %v52
    %s97 = scalar_lea.vmem [#allocation5], 80
    %98 = vst [vmem:[%s97] sm:$0xff] %v96
    %v99 = vmul.f32 %v50, 0.4570458
    %v100 = vmul.f32 %v66, 5.0
    %v101 = vsub.f32 %v100, 1.0
    %v102 = vmul.f32 %v99, %v101
    %s103 = scalar_lea.vmem [#allocation5], 88
    %104 = vst [vmem:[%s103] sm:$0xff] %v102
    %v105 = vmul.f32 %v52, 0.37317634
    %v106 = vsub.f32 %v100, 3.0
    %v107 = vmul.f32 %v105, %v106
    %s108 = scalar_lea.vmem [#allocation5], 96
    %109 = vst [vmem:[%s108] sm:$0xff] %v107
    %v110 = vmul.f32 %v48, 0.4570458
    %v111 = vmul.f32 %v110, %v101
    %s112 = scalar_lea.vmem [#allocation5], 104
    %113 = vst [vmem:[%s112] sm:$0xff] %v111
    %v114 = vmul.f32 %v52, 1.4453057
    %v115 = vmul.f32 %v114, %v84
    %s116 = scalar_lea.vmem [#allocation5], 112
    %117 = vst [vmem:[%s116] sm:$0xff] %v115
    %v118 = vmul.f32 %v48, 0.5900436
    %v119 = vmul.f32 %v65, 3.0
    %v120 = vsub.f32 %v64, %v119
    %v121 = vmul.f32 %v118, %v120
    %s122 = scalar_lea.vmem [#allocation5], 120
    %123 = vst [vmem:[%s122] sm:$0xff] %v121
    // Predicated region
    $region10: #{tpu_custom_call.1} parent=1 // pred_check
      _
    $region11: #{tpu_custom_call.1} parent=1 // pred_check_branch
      %125 = sbr.rel (0) target = $region13
    $region12: #{tpu_custom_call.1} parent=1 // pred_region
      %127 = vsyncadd [#allocation4], 0
      %s128 = sshll.u32 [#allocation5], 4
      %s129 = int_to_ptr.vmem [resolvable:$true] %s128
      %s130 = sshll.u32 %s1, 4
      %s131 = int_to_ptr.hbm [resolvable:$true] %s130
      %136 = dma.vmem_to_hbm [thread:$0]  %s129, 2048, %s131, [#allocation4], 128, 128, 8
    $region13: #{tpu_custom_call.1} parent=1 // pred_fallthru
      _
    // Predicated region
    $region14: #{tpu_custom_call.1} parent=1 // pred_check
      _
    $region15: #{tpu_custom_call.1} parent=1 // pred_check_branch
      %138 = sbr.rel (0) target = $region17
    $region16: #{tpu_custom_call.1} parent=1 // pred_region
      %140 = dma.done [#allocation4], 2048
    $region17: #{tpu_custom_call.1} parent=1 // pred_fallthru
      _
    %141 = vsyncpa [#allocation3], 1
    %142 = vsyncpa [#allocation4], 1

</llo_original>
